<compile_context>
chip_gen: v6e
topology: v6e:2x2x1
jax: 0.10.0
libtpu: 0.0.40
codegen_flags: <defaults>
</compile_context>

<pallas_src>
import functools

import jax
import jax.numpy as jnp
from jax.experimental import pallas as pl
from jax.experimental.pallas import tpu as pltpu

BN_EPS = 1e-5
N_CLASSES = 258            # from the reference script
LANE = 128


def _round_up(x, m):
    return (x + m - 1) // m * m


# ----------------------------------------------------------------------------
# Pallas kernel: fused BN(eval) + global average pool + FC head
# ----------------------------------------------------------------------------
def _early_exit_kernel(x_ref, scale_ref, bias_ref, w_ref, fcb_ref,
                       o_ref, acc_ref, *, inv_hw):
    # x_ref:     (NT, C, HW_TILE) feature-map slab (spatial on the lane axis)
    # scale/bias:(1, C)           folded eval-mode BatchNorm affine
    # w_ref:     (C, NC_PAD)      FC weight, transposed + lane-padded
    # fcb_ref:   (1, NC_PAD)      FC bias, lane-padded
    # o_ref:     (NT, NC_PAD)     logits (lane-dense; wrapper slices)
    # acc_ref:   (NT, C) f32      VMEM scratch: partial spatial sums
    t = pl.program_id(1)

    @pl.when(t == 0)
    def _init():
        acc_ref[...] = jnp.zeros_like(acc_ref)

    # Partial global-average-pool: sum this spatial tile per (n, c).
    acc_ref[...] += jnp.sum(x_ref[...], axis=-1)

    @pl.when(t == pl.num_programs(1) - 1)
    def _finalize():
        pooled = acc_ref[...] * inv_hw                        # AdaptiveAvgPool2d(1)
        pooled = pooled * scale_ref[...] + bias_ref[...]       # BatchNorm2d (eval)
        o_ref[...] = (
            jnp.dot(pooled, w_ref[...], preferred_element_type=jnp.float32)
            + fcb_ref[...]
        )


# ----------------------------------------------------------------------------
# Wrapper (layout plumbing only; all compute stays inside the kernel)
# ----------------------------------------------------------------------------
def _pick_hw_tile(n_tile, c, hw, budget_bytes=4 << 20):
    """Lane tile over H*W: multiple of 128, sized so the x block stays small."""
    hw_lanes = _round_up(hw, LANE)
    per_lane_bytes = max(1, n_tile * c * 4)
    max_lanes = max(LANE, (budget_bytes // per_lane_bytes) // LANE * LANE)
    return int(min(hw_lanes, max_lanes, 8192))


def early_exit_forward(x_nchw, params):
    """EarlyExitBlock.forward for exit_type='bnpool' (eval-mode BatchNorm)."""
    x = x_nchw.astype(jnp.float32)
    n, c, h, w = x.shape
    hw = h * w
    nc = params["fc_w"].shape[0]

    # Eval-mode BatchNorm folded to a per-channel affine (scale, bias).
    gamma, beta, mean, var = params["bn"]
    scale = gamma / jnp.sqrt(var + BN_EPS)
    bias = beta - mean * scale

    # Batch tiling (parallel axis); spatial tiling (reduction axis).
    n_tile = n if n <= 8 else 8
    n_pad = _round_up(n, n_tile)
    hw_tile = _pick_hw_tile(n_tile, c, hw)
    hw_pad = _round_up(hw, hw_tile)

    # NCHW -> (N, C, H*W) is a free contiguous reshape; zero-pad N / H*W only
    # as needed (zeros on the spatial axis are safe: BN is applied post-pool).
    x3 = x.reshape(n, c, hw)
    if n_pad != n or hw_pad != hw:
        x3 = jnp.pad(x3, ((0, n_pad - n), (0, 0), (0, hw_pad - hw)))

    # FC weight (n_classes, C) -> (C, NC_PAD); bias -> (1, NC_PAD).
    nc_pad = _round_up(nc, LANE)
    w2 = jnp.zeros((c, nc_pad), jnp.float32).at[:, :nc].set(params["fc_w"].T)
    b2 = jnp.zeros((1, nc_pad), jnp.float32).at[:, :nc].set(params["fc_b"])

    grid = (n_pad // n_tile, hw_pad // hw_tile)
    kernel = functools.partial(_early_exit_kernel, inv_hw=1.0 / hw)
    out = pl.pallas_call(
        kernel,
        out_shape=jax.ShapeDtypeStruct((n_pad, nc_pad), jnp.float32),
        grid_spec=pltpu.PrefetchScalarGridSpec(
            num_scalar_prefetch=0,
            grid=grid,
            in_specs=[
                pl.BlockSpec((n_tile, c, hw_tile), lambda i, t: (i, 0, t)),
                pl.BlockSpec((1, c), lambda i, t: (0, 0)),
                pl.BlockSpec((1, c), lambda i, t: (0, 0)),
                pl.BlockSpec((c, nc_pad), lambda i, t: (0, 0)),
                pl.BlockSpec((1, nc_pad), lambda i, t: (0, 0)),
            ],
            out_specs=pl.BlockSpec((n_tile, nc_pad), lambda i, t: (i, 0)),
            scratch_shapes=[pltpu.VMEM((n_tile, c), jnp.float32)],
        ),
        compiler_params=pltpu.CompilerParams(
            dimension_semantics=("parallel", "arbitrary"),
        ),
    )(x3, scale.reshape(1, c), bias.reshape(1, c), w2, b2)
    return out[:n, :nc]


# ----------------------------------------------------------------------------
# Parameters (deterministic, PyTorch-style shapes)
# ----------------------------------------------------------------------------
def make_params(key, channel, n_classes=N_CLASSES):
    kg, kb, km, kv, kw, kfb = jax.random.split(key, 6)
    # BatchNorm2d affine weights + running stats (eval mode).  PyTorch default
    # init is gamma=1, beta=0, mean=0, var=1; use deterministic non-trivial
    # values here so the BN math is actually exercised.
    gamma = 1.0 + 0.1 * jax.random.normal(kg, (channel,), jnp.float32)
    beta = 0.1 * jax.random.normal(kb, (channel,), jnp.float32)
    mean = 0.1 * jax.random.normal(km, (channel,), jnp.float32)
    var = jax.random.uniform(kv, (channel,), jnp.float32, 0.5, 1.5)
    # nn.Linear(channel, n_classes) default init: U(-1/sqrt(fan_in), +).
    bound = 1.0 / (channel ** 0.5)
    fc_w = jax.random.uniform(kw, (n_classes, channel), jnp.float32,
                              -bound, bound)
    fc_b = jax.random.uniform(kfb, (n_classes,), jnp.float32, -bound, bound)
    return {"bn": (gamma, beta, mean, var), "fc_w": fc_w, "fc_b": fc_b}


if __name__ == "__main__":
    key = jax.random.PRNGKey(0)
    pkey, xkey = jax.random.split(key)
    N, C, H, W = 2, 4, 16, 16
    params = make_params(pkey, C, N_CLASSES)
    x = jax.random.normal(xkey, (N, C, H, W), jnp.float32)

    logits = jax.jit(early_exit_forward)(x, params)
    jax.block_until_ready(logits)

    # Pure-JAX reference (BN eval -> global avg pool -> flatten -> Linear).
    gamma, beta, mean, var = params["bn"]
    xr = (x - mean[None, :, None, None]) / jnp.sqrt(
        var[None, :, None, None] + BN_EPS)
    xr = xr * gamma[None, :, None, None] + beta[None, :, None, None]
    pooled = xr.mean(axis=(2, 3))
    ref = jnp.dot(pooled, params["fc_w"].T,
                  precision=jax.lax.Precision.HIGHEST) + params["fc_b"]

    assert logits.shape == (N, N_CLASSES)
    assert bool(jnp.all(jnp.isfinite(logits)))
    assert bool(jnp.allclose(logits, ref, atol=1e-3, rtol=1e-3))
    print("KERNEL_OK")
</pallas_src>

<mosaic_0001>
module attributes {stable_mosaic.version = 11 : i64} {
  func.func @_early_exit_kernel(%arg0: i32, %arg1: i32, %arg2: memref<2x4x256xf32, #tpu.memory_space<vmem>>, %arg3: memref<1x4xf32, #tpu.memory_space<vmem>>, %arg4: memref<1x4xf32, #tpu.memory_space<vmem>>, %arg5: memref<4x384xf32, #tpu.memory_space<vmem>>, %arg6: memref<1x384xf32, #tpu.memory_space<vmem>>, %arg7: memref<2x384xf32, #tpu.memory_space<vmem>>, %arg8: memref<2x4xf32, #tpu.memory_space<vmem>>) attributes {dimension_semantics = [#tpu.dimension_semantics<parallel>, #tpu.dimension_semantics<arbitrary>], iteration_bounds = array<i64: 1, 1>, scalar_prefetch = 0 : i64, scratch_operands = 1 : i64, tpu.core_type = #tpu.core_type<tc>, window_params = [{transform_indices = @transform_0, window_bounds = array<i64: 2, 4, 256>}, {pipeline_mode = #tpu.pipeline_mode<synchronous>, transform_indices = @transform_1, window_bounds = array<i64: 1, 4>}, {pipeline_mode = #tpu.pipeline_mode<synchronous>, transform_indices = @transform_2, window_bounds = array<i64: 1, 4>}, {pipeline_mode = #tpu.pipeline_mode<synchronous>, transform_indices = @transform_3, window_bounds = array<i64: 4, 384>}, {pipeline_mode = #tpu.pipeline_mode<synchronous>, transform_indices = @transform_4, window_bounds = array<i64: 1, 384>}, {transform_indices = @transform_5, window_bounds = array<i64: 2, 384>}]} {
    %c0_i32 = arith.constant 0 : i32
    %0 = arith.cmpi eq, %arg1, %c0_i32 : i32
    %1 = arith.extui %0 : i1 to i32
    %c0_i32_0 = arith.constant 0 : i32
    %2 = arith.cmpi ne, %1, %c0_i32_0 : i32
    scf.if %2 {
      %cst_9 = arith.constant 0.000000e+00 : f32
      %11 = vector.broadcast %cst_9 : f32 to vector<2x4xf32>
      %c0_10 = arith.constant 0 : index
      %c0_11 = arith.constant 0 : index
      %12 = vector.load %arg8[%c0_10, %c0_11] : memref<2x4xf32, #tpu.memory_space<vmem>>, vector<2x4xf32>
      tpu.vector_store %arg8[%c0_10, %c0_11], %11 {strides = array<i32>} : memref<2x4xf32, #tpu.memory_space<vmem>>, vector<2x4xf32>,
    } else {
    }
    %c0 = arith.constant 0 : index
    %c0_1 = arith.constant 0 : index
    %3 = vector.load %arg8[%c0, %c0_1] : memref<2x4xf32, #tpu.memory_space<vmem>>, vector<2x4xf32>
    %c0_2 = arith.constant 0 : index
    %c0_3 = arith.constant 0 : index
    %c0_4 = arith.constant 0 : index
    %4 = vector.load %arg2[%c0_2, %c0_3, %c0_4] : memref<2x4x256xf32, #tpu.memory_space<vmem>>, vector<2x4x256xf32>
    %cst = arith.constant dense<0.000000e+00> : vector<2x4xf32>
    %5 = vector.multi_reduction <add>, %4, %cst [2] : vector<2x4x256xf32> to vector<2x4xf32>
    %6 = arith.addf %3, %5 : vector<2x4xf32>
    %c0_5 = arith.constant 0 : index
    %c0_6 = arith.constant 0 : index
    %7 = vector.load %arg8[%c0_5, %c0_6] : memref<2x4xf32, #tpu.memory_space<vmem>>, vector<2x4xf32>
    tpu.vector_store %arg8[%c0_5, %c0_6], %6 {strides = array<i32>} : memref<2x4xf32, #tpu.memory_space<vmem>>, vector<2x4xf32>,
    %c0_i32_7 = arith.constant 0 : i32
    %8 = arith.cmpi eq, %arg1, %c0_i32_7 : i32
    %9 = arith.extui %8 : i1 to i32
    %c0_i32_8 = arith.constant 0 : i32
    %10 = arith.cmpi ne, %9, %c0_i32_8 : i32
    scf.if %10 {
      %c0_9 = arith.constant 0 : index
      %c0_10 = arith.constant 0 : index
      %11 = vector.load %arg8[%c0_9, %c0_10] : memref<2x4xf32, #tpu.memory_space<vmem>>, vector<2x4xf32>
      %cst_11 = arith.constant 3.906250e-03 : f32
      %12 = vector.broadcast %cst_11 : f32 to vector<2x4xf32>
      %13 = arith.mulf %11, %12 : vector<2x4xf32>
      %c0_12 = arith.constant 0 : index
      %c0_13 = arith.constant 0 : index
      %14 = vector.load %arg3[%c0_12, %c0_13] : memref<1x4xf32, #tpu.memory_space<vmem>>, vector<1x4xf32>
      %15 = vector.broadcast %14 : vector<1x4xf32> to vector<2x4xf32>
      %16 = arith.mulf %13, %15 : vector<2x4xf32>
      %c0_14 = arith.constant 0 : index
      %c0_15 = arith.constant 0 : index
      %17 = vector.load %arg4[%c0_14, %c0_15] : memref<1x4xf32, #tpu.memory_space<vmem>>, vector<1x4xf32>
      %18 = vector.broadcast %17 : vector<1x4xf32> to vector<2x4xf32>
      %19 = arith.addf %16, %18 : vector<2x4xf32>
      %c0_16 = arith.constant 0 : index
      %c0_17 = arith.constant 0 : index
      %20 = vector.load %arg5[%c0_16, %c0_17] : memref<4x384xf32, #tpu.memory_space<vmem>>, vector<4x384xf32>
      %cst_18 = arith.constant dense<0.000000e+00> : vector<2x384xf32>
      %21 = tpu.matmul %19, %20, %cst_18 {dimension_numbers = #tpu.dot_dimension_numbers<[1], [0], [0], [1], [0, 0, 1, 1], [], []>} : vector<2x4xf32>, vector<4x384xf32>, vector<2x384xf32> -> vector<2x384xf32>
      %c0_19 = arith.constant 0 : index
      %c0_20 = arith.constant 0 : index
      %22 = vector.load %arg6[%c0_19, %c0_20] : memref<1x384xf32, #tpu.memory_space<vmem>>, vector<1x384xf32>
      %23 = vector.broadcast %22 : vector<1x384xf32> to vector<2x384xf32>
      %24 = arith.addf %21, %23 : vector<2x384xf32>
      %c0_21 = arith.constant 0 : index
      %c0_22 = arith.constant 0 : index
      %25 = vector.load %arg7[%c0_21, %c0_22] : memref<2x384xf32, #tpu.memory_space<vmem>>, vector<2x384xf32>
      tpu.vector_store %arg7[%c0_21, %c0_22], %24 {strides = array<i32>} : memref<2x384xf32, #tpu.memory_space<vmem>>, vector<2x384xf32>,
    } else {
    }
    return
  }
  func.func @transform_0(%arg0: i32, %arg1: i32) -> (i32, i32, i32) {
    %c0_i32 = arith.constant 0 : i32
    %c0_i32_0 = arith.constant 0 : i32
    return %arg0, %c0_i32, %arg1 : i32, i32, i32
  }
  func.func @transform_1(%arg0: i32, %arg1: i32) -> (i32, i32) {
    %c0_i32 = arith.constant 0 : i32
    %c0_i32_0 = arith.constant 0 : i32
    %c0_i32_1 = arith.constant 0 : i32
    return %c0_i32, %c0_i32_0 : i32, i32
  }
  func.func @transform_2(%arg0: i32, %arg1: i32) -> (i32, i32) {
    %c0_i32 = arith.constant 0 : i32
    %c0_i32_0 = arith.constant 0 : i32
    %c0_i32_1 = arith.constant 0 : i32
    return %c0_i32, %c0_i32_0 : i32, i32
  }
  func.func @transform_3(%arg0: i32, %arg1: i32) -> (i32, i32) {
    %c0_i32 = arith.constant 0 : i32
    %c0_i32_0 = arith.constant 0 : i32
    %c0_i32_1 = arith.constant 0 : i32
    return %c0_i32, %c0_i32_0 : i32, i32
  }
  func.func @transform_4(%arg0: i32, %arg1: i32) -> (i32, i32) {
    %c0_i32 = arith.constant 0 : i32
    %c0_i32_0 = arith.constant 0 : i32
    %c0_i32_1 = arith.constant 0 : i32
    return %c0_i32, %c0_i32_0 : i32, i32
  }
  func.func @transform_5(%arg0: i32, %arg1: i32) -> (i32, i32) {
    %c0_i32 = arith.constant 0 : i32
    %c0_i32_0 = arith.constant 0 : i32
    return %arg0, %c0_i32 : i32, i32
  }
}

</mosaic_0001>

<llo_original>
// kernel: early_exit_forward.1
$region0: #{early_exit_forward.1}
  #allocation0 [shape = 'u32[]', space=smem, size = 0x4, offset = 0x4, fixed_abs, tag = 'smem constant byte address 0x4 - core index']
  #allocation1 [shape = 'u32[144,128]{1,0:T(1,128)}', space=vmem, size = 0x12000, scoped, tag = 'internal scratch']
  #allocation2 [shape = 'f32[2,4]{1,0:T(2,128)}', space=vmem, size = 0x400, scoped, tag = 'scratch operand']
  %s0 = inlined_call_operand.vmem [shape: f32[2,4,256], index: 0, kind: input, shape index: {}]
  %s1 = inlined_call_operand.vmem [shape: f32[1,4], index: 1, kind: input, shape index: {}]
  %s2 = inlined_call_operand.vmem [shape: f32[1,4], index: 2, kind: input, shape index: {}]
  %s3 = inlined_call_operand.vmem [shape: f32[4,384], index: 3, kind: input, shape index: {}]
  %s4 = inlined_call_operand.vmem [shape: f32[1,384], index: 4, kind: input, shape index: {}]
  %s5 = inlined_call_operand.hbm [shape: f32[2,384], index: 5, kind: output, shape index: {}]
  %s6 = sld [smem:[#allocation0]]
  $region38: #{early_exit_forward.1} parent=0
    _
  %s8 = ssub.s32 1, %s6
  %s9 = scalar_select 0, %s8, %s6
  $region1: #{early_exit_forward.1} parent=0
    #allocation3 [shape = 'u8[3072]{0}', space=vmem, size = 0xc00, scoped, tag = 'output window, operand 0, single buffered']
    #allocation4 [shape = 's32[1]{0}', space=sflag, size = 0x4, scoped, tag = 'scoped memory for early_exit_forward.1']
    %10 = vsyncpa [#allocation4], 0
    // Predicated region
    $region2: #{early_exit_forward.1} parent=1 // pred_check
      _
    $region3: #{early_exit_forward.1} parent=1 // pred_check_branch
      %12 = sbr.rel (0) target = $region5
    $region4: #{early_exit_forward.1} parent=1 // pred_region
      _
    $region5: #{early_exit_forward.1} parent=1 // pred_fallthru
      _
    // Predicated region
    $region6: #{early_exit_forward.1} parent=1 // pred_check
      _
    $region7: #{early_exit_forward.1} parent=1 // pred_check_branch
      %14 = sbr.rel (0) target = $region9
    $region8: #{early_exit_forward.1} parent=1 // pred_region
      _
    $region9: #{early_exit_forward.1} parent=1 // pred_fallthru
      _
    // Predicated region
    $region10: #{early_exit_forward.1} parent=1 // pred_check
      _
    $region11: #{early_exit_forward.1} parent=1 // pred_check_branch
      %16 = sbr.rel (0) target = $region13
    $region12: #{early_exit_forward.1} parent=1 // pred_region
      _
    $region13: #{early_exit_forward.1} parent=1 // pred_fallthru
      _
    // Predicated region
    $region14: #{early_exit_forward.1} parent=1 // pred_check
      _
    $region15: #{early_exit_forward.1} parent=1 // pred_check_branch
      %18 = sbr.rel (0) target = $region17
    $region16: #{early_exit_forward.1} parent=1 // pred_region
      _
    $region17: #{early_exit_forward.1} parent=1 // pred_fallthru
      _
    // Predicated region
    $region18: #{early_exit_forward.1} parent=1 // pred_check
      _
    $region19: #{early_exit_forward.1} parent=1 // pred_check_branch
      %20 = sbr.rel (0) target = $region21
    $region20: #{early_exit_forward.1} parent=1 // pred_region
      _
    $region21: #{early_exit_forward.1} parent=1 // pred_fallthru
      _
    %p21 = scmp.eq.s32.totalorder 0, 0
    // Predicated region
    $region22: #{early_exit_forward.1} parent=1 // pred_check
      %p22 = pneg %p21
    $region23: #{early_exit_forward.1} parent=1 // pred_check_branch
      %24 = sbr.rel (%p22) target = $region25
    $region24: #{early_exit_forward.1} parent=1 // pred_region
      %vm25 = vcmask 25600
      %26 = vst.msk [vmem:[#allocation2] sm:$0x3] %vm25, 0.0
    $region25: #{early_exit_forward.1} parent=1 // pred_fallthru
      _
    %v27 = vld [vmem:[#allocation2] sm:$0x3]
    %v28 = vld [vmem:[%s0] sm:$0xff]
    %v29 = vld [vmem:[%s0 + $0x8] sm:$0xff]
    %v32 = vcombine.high %v28, %v28
    %v33 = vcombine.high %v29, %v29
    %vm36 = vcmask 1043456
    %v37 = vsel %vm36, %v28, 0.0
    %v38 = vsel %vm36, %v32, 0.0
    %v39 = vadd.f32 %v37, %v38
    %40 = vadd.xlane.f32.xlu0 %v39
    %v41 = vpop.xlane.xlu0 %40
    %v42 = vsel %vm36, %v29, 0.0
    %v43 = vsel %vm36, %v33, 0.0
    %v44 = vadd.f32 %v42, %v43
    %45 = vadd.xlane.f32.xlu0 %v44
    %v46 = vpop.xlane.xlu0 %45
    %v49 = vlaneseq
    %v50 = vand.u32 %v49, 127
    %v51 = vlaneseq
    %v52 = vshrl.u32 %v51, 7
    %v53 = vsub.s32 %v50, %v52
    %v54 = vrot.slane %v41, %v53
    %v55 = vlaneseq
    %v56 = vshrl.u32 %v55, 7
    %v57 = vsub.s32 %v50, %v56
    %v58 = vrot.slane %v46, %v57
    %vm59 = vcmask 1041409
    %v60 = vsel %vm59, %v58, %v54
    %v62 = vadd.f32 %v27, %v60
    %vm63 = vcmask 25600
    %64 = vst.msk [vmem:[#allocation2] sm:$0x3] %vm63, %v62
    // Predicated region
    $region26: #{early_exit_forward.1} parent=1 // pred_check
      %p65 = pneg %p21
    $region27: #{early_exit_forward.1} parent=1 // pred_check_branch
      %67 = sbr.rel (%p65) target = $region29
    $region28: #{early_exit_forward.1} parent=1 // pred_region
      %v68 = vld [vmem:[#allocation2] sm:$0x3]
      %v69 = vmul.f32 %v68, 0.00390625
      %v70 = vld [vmem:[%s1] sm:$0x1]
      %v72 = vlaneseq
      %v73 = vshrl.u32 %v72, 7
      %v74 = vsub.s32 0, %v73
      %v75 = vrot.slane %v70, %v74
      %v77 = vmul.f32 %v69, %v75
      %v78 = vld [vmem:[%s2] sm:$0x1]
      %v80 = vlaneseq
      %v81 = vshrl.u32 %v80, 7
      %v82 = vsub.s32 0, %v81
      %v83 = vrot.slane %v78, %v82
      %v85 = vadd.f32 %v77, %v83
      %v86 = vld [vmem:[%s3] sm:$0xff]
      %v87 = vld [vmem:[%s3 + $0x8] sm:$0xf]
      %v88 = vld [vmem:[%s4] sm:$0x7]
      %v90 = vlaneseq
      %v91 = vshrl.u32 %v90, 7
      %v92 = vsub.s32 0, %v91
      %v93 = vrot.slane %v88, %v92
      %v94 = vlaneseq
      %v95 = vshrl.u32 %v94, 7
      %v96 = vsub.s32 1, %v95
      %v97 = vrot.slane %v88, %v96
      %v98 = vlaneseq
      %v99 = vshrl.u32 %v98, 7
      %v100 = vsub.s32 2, %v99
      %v101 = vrot.slane %v88, %v100
      %v107 = vcombine.high %v86, %v86
      %vm108 = vcmask 31744
      %v110 = vsel %vm108, %v85, 0
      %v112 = vsel %vm36, %v86, 0
      %v114 = vsel %vm36, %v107, 0
      %v116 = vsel %vm36, %v87, 0
      %118 = vmatprep.subr.mxu0 0.0
      %119 = vmatpush1.msra.mxu0 0.0
      %120 = vmatprep.subr.mxu0 0.0
      %121 = vmatpush1.msra.mxu0 0.0
      %122 = vmatprep.subr.mxu0 0.0
      %123 = vmatpush1.msra.mxu0 0.0
      %124 = vmatprep.subr.mxu0 0.0
      %125 = vmatpush1.msra.mxu0 0.0
      %126 = vmatprep.subr.mxu0 0.0
      %127 = vmatpush1.msra.mxu0 0.0
      %128 = vmatprep.subr.mxu0 0.0
      %129 = vmatpush1.msra.mxu0 0.0
      %130 = vmatprep.subr.mxu0 0.0
      %131 = vmatpush1.msra.mxu0 0.0
      %132 = vmatprep.subr.mxu0 0.0
      %133 = vmatpush1.msra.mxu0 0.0
      %134 = vmatprep.subr.mxu0 0.0
      %135 = vmatpush1.msra.mxu0 0.0
      %136 = vmatprep.subr.mxu0 0.0
      %137 = vmatpush1.msra.mxu0 0.0
      %138 = vmatprep.subr.mxu0 0.0
      %139 = vmatpush1.msra.mxu0 0.0
      %140 = vmatprep.subr.mxu0 0.0
      %141 = vmatpush1.msra.mxu0 0.0
      %142 = vmatprep.subr.mxu0 0.0
      %143 = vmatpush1.msra.mxu0 0.0
      %144 = vmatprep.subr.mxu0 0.0
      %145 = vmatpush1.msra.mxu0 0.0
      %146 = vmatprep.subr.mxu0 0.0
      %147 = vmatpush1.msra.mxu0 0.0
      %148 = vmatprep.subr.mxu0 %v114
      %149 = vmatpush1.msra.mxu0 %v112
      %150 = vmatprep.subr.mxu0 0.0
      %151 = vmatpush2.msra.mxu0 0.0
      %152 = vmatprep.subr.mxu0 0.0
      %153 = vmatpush2.msra.mxu0 0.0
      %154 = vmatprep.subr.mxu0 0.0
      %155 = vmatpush2.msra.mxu0 0.0
      %156 = vmatprep.subr.mxu0 0.0
      %157 = vmatpush2.msra.mxu0 0.0
      %158 = vmatprep.subr.mxu0 0.0
      %159 = vmatpush2.msra.mxu0 0.0
      %160 = vmatprep.subr.mxu0 0.0
      %161 = vmatpush2.msra.mxu0 0.0
      %162 = vmatprep.subr.mxu0 0.0
      %163 = vmatpush2.msra.mxu0 0.0
      %164 = vmatprep.subr.mxu0 0.0
      %165 = vmatpush2.msra.mxu0 0.0
      %166 = vmatprep.subr.mxu0 0.0
      %167 = vmatpush2.msra.mxu0 0.0
      %168 = vmatprep.subr.mxu0 0.0
      %169 = vmatpush2.msra.mxu0 0.0
      %170 = vmatprep.subr.mxu0 0.0
      %171 = vmatpush2.msra.mxu0 0.0
      %172 = vmatprep.subr.mxu0 0.0
      %173 = vmatpush2.msra.mxu0 0.0
      %174 = vmatprep.subr.mxu0 0.0
      %175 = vmatpush2.msra.mxu0 0.0
      %176 = vmatprep.subr.mxu0 0.0
      %177 = vmatpush2.msra.mxu0 0.0
      %178 = vmatprep.subr.mxu0 0.0
      %179 = vmatpush2.msra.mxu0 0.0
      %180 = vmatprep.subr.mxu0 0.0
      %181 = vmatpush2.msra.mxu0 0.0
      %182 = vmatprep.mubr.f32.mxu0 0.0
      %183 = vmatmul.mubr.f32.gmra.mxu0 %v110
      %v184 = vpop.f32.mrf.mxu0
      %v185 = vadd.f32 %v93, %v184
      %v186 = vpop.f32.mrf.mxu0
      %v187 = vadd.f32 %v97, %v186
      %188 = vdwg.mxu0
      %189 = vmatprep.subr.mxu0 0.0
      %190 = vmatpush1.msra.mxu0 0.0
      %191 = vmatprep.subr.mxu0 0.0
      %192 = vmatpush1.msra.mxu0 0.0
      %193 = vmatprep.subr.mxu0 0.0
      %194 = vmatpush1.msra.mxu0 0.0
      %195 = vmatprep.subr.mxu0 0.0
      %196 = vmatpush1.msra.mxu0 0.0
      %197 = vmatprep.subr.mxu0 0.0
      %198 = vmatpush1.msra.mxu0 0.0
      %199 = vmatprep.subr.mxu0 0.0
      %200 = vmatpush1.msra.mxu0 0.0
      %201 = vmatprep.subr.mxu0 0.0
      %202 = vmatpush1.msra.mxu0 0.0
      %203 = vmatprep.subr.mxu0 0.0
      %204 = vmatpush1.msra.mxu0 0.0
      %205 = vmatprep.subr.mxu0 0.0
      %206 = vmatpush1.msra.mxu0 0.0
      %207 = vmatprep.subr.mxu0 0.0
      %208 = vmatpush1.msra.mxu0 0.0
      %209 = vmatprep.subr.mxu0 0.0
      %210 = vmatpush1.msra.mxu0 0.0
      %211 = vmatprep.subr.mxu0 0.0
      %212 = vmatpush1.msra.mxu0 0.0
      %213 = vmatprep.subr.mxu0 0.0
      %214 = vmatpush1.msra.mxu0 0.0
      %215 = vmatprep.subr.mxu0 0.0
      %216 = vmatpush1.msra.mxu0 0.0
      %217 = vmatprep.subr.mxu0 0.0
      %218 = vmatpush1.msra.mxu0 0.0
      %219 = vmatprep.subr.mxu0 0.0
      %220 = vmatpush1.msra.mxu0 %v116
      %221 = vmatprep.subr.mxu0 0.0
      %222 = vmatpush2.msra.mxu0 0.0
      %223 = vmatprep.subr.mxu0 0.0
      %224 = vmatpush2.msra.mxu0 0.0
      %225 = vmatprep.subr.mxu0 0.0
      %226 = vmatpush2.msra.mxu0 0.0
      %227 = vmatprep.subr.mxu0 0.0
      %228 = vmatpush2.msra.mxu0 0.0
      %229 = vmatprep.subr.mxu0 0.0
      %230 = vmatpush2.msra.mxu0 0.0
      %231 = vmatprep.subr.mxu0 0.0
      %232 = vmatpush2.msra.mxu0 0.0
      %233 = vmatprep.subr.mxu0 0.0
      %234 = vmatpush2.msra.mxu0 0.0
      %235 = vmatprep.subr.mxu0 0.0
      %236 = vmatpush2.msra.mxu0 0.0
      %237 = vmatprep.subr.mxu0 0.0
      %238 = vmatpush2.msra.mxu0 0.0
      %239 = vmatprep.subr.mxu0 0.0
      %240 = vmatpush2.msra.mxu0 0.0
      %241 = vmatprep.subr.mxu0 0.0
      %242 = vmatpush2.msra.mxu0 0.0
      %243 = vmatprep.subr.mxu0 0.0
      %244 = vmatpush2.msra.mxu0 0.0
      %245 = vmatprep.subr.mxu0 0.0
      %246 = vmatpush2.msra.mxu0 0.0
      %247 = vmatprep.subr.mxu0 0.0
      %248 = vmatpush2.msra.mxu0 0.0
      %249 = vmatprep.subr.mxu0 0.0
      %250 = vmatpush2.msra.mxu0 0.0
      %251 = vmatprep.subr.mxu0 0.0
      %252 = vmatpush2.msra.mxu0 0.0
      %253 = vmatprep.mubr.f32.mxu0 0.0
      %254 = vmatmul.mubr.f32.gmra.mxu0 %v110
      %v255 = vpop.f32.mrf.mxu0
      %v256 = vadd.f32 %v101, %v255
      %v257 = vpop.f32.mrf.mxu0
      %258 = vdwg.mxu0
      %v262 = vcombine.low %v185, %v187
      %v264 = vunpack.c.l.s4 1983009808
      %v265 = vunpack.c.0.s8 %v264
      %v266 = vlaneseq
      %v267 = vshrl.u32 %v266, 7
      %v268 = vsub.s32 %v265, %v267
      %v269 = vrot.slane %v262, %v268
      %v271 = vunpack.c.l.s4 1983009808
      %v272 = vunpack.c.0.s8 %v271
      %v273 = vlaneseq
      %v274 = vshrl.u32 %v273, 7
      %v275 = vsub.s32 %v272, %v274
      %v276 = vrot.slane %v256, %v275
      %v277 = vcombine.low %v269, %v276
      %279 = vst [vmem:[#allocation3] sm:$0x3f] %v277
    $region29: #{early_exit_forward.1} parent=1 // pred_fallthru
      _
    // Predicated region
    $region30: #{early_exit_forward.1} parent=1 // pred_check
      _
    $region31: #{early_exit_forward.1} parent=1 // pred_check_branch
      %281 = sbr.rel (0) target = $region33
    $region32: #{early_exit_forward.1} parent=1 // pred_region
      %s283 = ssub.s32 96, 96
      %284 = vsyncadd [#allocation4], %s283
      %s286 = sshll.u32 [#allocation3], 4
      %s287 = int_to_ptr.vmem [resolvable:$true] %s286
      %289 = dma.vmem_to_hbm [thread:$0]  %s287, 96, %s5, [#allocation4]
    $region33: #{early_exit_forward.1} parent=1 // pred_fallthru
      _
    // Predicated region
    $region34: #{early_exit_forward.1} parent=1 // pred_check
      _
    $region35: #{early_exit_forward.1} parent=1 // pred_check_branch
      %291 = sbr.rel (0) target = $region37
    $region36: #{early_exit_forward.1} parent=1 // pred_region
      %292 = dma.done [#allocation4], 96
    $region37: #{early_exit_forward.1} parent=1 // pred_fallthru
      _
    %293 = vsyncpa [#allocation4], 1

</llo_original>
